<compile_context>
chip_gen: v7x
topology: tpu7x:2x2x1
jax: 0.10.0
libtpu: 0.0.40
codegen_flags: <defaults>
</compile_context>

<pallas_src>
import functools

import jax
import jax.numpy as jnp
from jax import lax
from jax.experimental import pallas as pl
from jax.experimental.pallas import tpu as pltpu


def _round_up(n, m):
    return ((n + m - 1) // m) * m


def _tpu_vmem_capacity_bytes():
    """Best-effort physical VMEM per TensorCore; conservative fallback (v7x)."""
    try:
        info = pltpu.get_tpu_info()
        for name in ("vmem_capacity_bytes", "vmem_size_bytes", "vmem_bytes"):
            v = getattr(info, name, None)
            if v:
                return int(v)
    except Exception:
        pass
    return 64 * 1024 * 1024


def _choose_u_tile(num_units, bytes_per_unit, budget_bytes, prefer_even_grid):
    """Largest divisor of num_units whose double-buffered tile fits the budget.

    On 2-TensorCore chips (v7x) prefer tiles that give an even grid length so
    both cores get balanced halves; on 1-TC chips just take the largest tile."""
    divisors = [t for t in range(1, num_units + 1) if num_units % t == 0]
    fitting = [t for t in divisors if 2 * t * bytes_per_unit <= budget_bytes] or [1]
    if prefer_even_grid:
        even = [t for t in fitting if (num_units // t) % 2 == 0]
        if even:
            return max(even)
    return max(fitting)


def _gru_kernel(x_ref, wi_ref, b_ref, hc_ref, out_ref):
    # x_ref:  (U_TILE, B, IN)    activations (same dtype as packed weights)
    # wi_ref: (U_TILE, IN, PP)   dense-packed [Wir|Wiz|Win], total padded to PP lanes
    # b_ref:  (U_TILE, 1, PP)    f32: [bir + h0@Whr + bhr | biz + h0@Whz + bhz | bin]
    # hc_ref: (U_TILE, 2, OUT)   f32: row 0 = gh_n = h0@Whn + bhn, row 1 = h0
    # out_ref:(U_TILE, B, OUT)   dense output, no lane padding
    u_tile, _, out_f = out_ref.shape

    def body(u, carry):
        # Input path: one packed matmul covering all three gates (f32 accumulation).
        gi = jnp.dot(x_ref[u], wi_ref[u],
                     preferred_element_type=jnp.float32) + b_ref[u]      # (B, PP) f32

        hc = hc_ref[u]                                                    # (2, OUT) f32
        gh_n = hc[0:1, :]                                                 # (1, OUT)
        h0 = hc[1:2, :]                                                   # (1, OUT)

        # Gate math in f32 on the VPU/EUP; hidden terms broadcast across the batch.
        r = jax.nn.sigmoid(gi[:, 0:out_f])
        z = jax.nn.sigmoid(gi[:, out_f:2 * out_f])
        n = jnp.tanh(gi[:, 2 * out_f:3 * out_f] + r * gh_n)
        y = n + z * (h0 - n)                       # == (1 - z) * n + z * h0
        out_ref[u] = y.astype(out_ref.dtype)
        return carry

    lax.fori_loop(0, u_tile, body, None, unroll=min(u_tile, 8))


def pack_params(params, hidden_init, weight_dtype=jnp.float32):
    """Pack, pad and precompute once (outside the per-step call).

    The full hidden path is precomputed here in f32 (valid because the single-step
    forward uses hidden == hidden_init): the r/z hidden terms are folded directly
    into the input-path bias; only gh_n and h0 feed the kernel."""
    (wir, wiz, win, whr, whz, whn, bir, biz, bin_, bhr, bhz, bhn) = params
    U, IN, OUT = wir.shape
    PP = _round_up(3 * OUT, 128)
    f32 = jnp.float32

    h0 = jnp.transpose(hidden_init, (1, 0, 2)).astype(f32)              # (U, 1, OUT)

    def hpath(w, b):
        return jnp.einsum('ubk,uko->ubo', h0, w.astype(f32)) + b.astype(f32)

    gh_r = hpath(whr, bhr)
    gh_z = hpath(whz, bhz)
    gh_n = hpath(whn, bhn)

    # Dense 3-gate packing; pad only the packed total up to a multiple of 128 lanes.
    wi = jnp.concatenate([wir, wiz, win], axis=-1)                      # (U, IN, 3*OUT)
    b = jnp.concatenate([bir.astype(f32) + gh_r,
                         biz.astype(f32) + gh_z,
                         bin_.astype(f32)], axis=-1)                    # (U, 1, 3*OUT)
    pad = PP - 3 * OUT
    if pad:
        wi = jnp.pad(wi, ((0, 0), (0, 0), (0, pad)))
        b = jnp.pad(b, ((0, 0), (0, 0), (0, pad)))

    hc = jnp.concatenate([gh_n, h0], axis=1)                            # (U, 2, OUT)

    return {
        "wi": wi.astype(weight_dtype),   # (U, IN, PP)
        "b": b.astype(f32),              # (U, 1, PP)
        "hc": hc.astype(f32),            # (U, 2, OUT)
    }


def _forward_unit_major(x_um, wi, b, hc):
    U, B, IN = x_um.shape
    PP = wi.shape[-1]
    OUT = hc.shape[-1]
    out_dtype = x_um.dtype
    x_um = x_um.astype(wi.dtype)   # halves x DMA when weights are bf16; no in-kernel cast

    def isize(a):
        return jnp.dtype(a.dtype).itemsize

    bytes_per_unit = (B * IN * isize(x_um) + IN * PP * isize(wi)
                      + PP * 4 + 2 * OUT * 4
                      + B * OUT * jnp.dtype(out_dtype).itemsize)

    vmem_cap = _tpu_vmem_capacity_bytes()
    if vmem_cap >= 100 * 1024 * 1024:
        # v5e / v6e: single TensorCore, 128 MiB VMEM -> big tiles, no even-grid pref.
        budget = 40 * 1024 * 1024
        prefer_even_grid = False
    else:
        # v7x-class: 2 TensorCores, 64 MiB/core -> balanced even grid, smaller tile.
        budget = 24 * 1024 * 1024
        prefer_even_grid = True

    u_tile = _choose_u_tile(U, bytes_per_unit, budget, prefer_even_grid)
    grid = (U // u_tile,)
    step_bytes = u_tile * bytes_per_unit

    vmem_limit = min(int(vmem_cap * 3 // 4),
                     max(4 * 1024 * 1024, 2 * step_bytes + (2 << 20)))
    if 2 * step_bytes > vmem_limit:
        raise ValueError(
            f"UnitWiseGRU tile ({2 * step_bytes} B double-buffered) does not fit "
            f"the VMEM limit ({vmem_limit} B); reduce batch/in/out features.")

    cost = pl.CostEstimate(
        flops=int(2 * U * B * IN * PP),
        transcendentals=int(3 * U * B * OUT),
        bytes_accessed=int(U * bytes_per_unit),
    )

    return pl.pallas_call(
        _gru_kernel,
        out_shape=jax.ShapeDtypeStruct((U, B, OUT), out_dtype),
        grid=grid,
        in_specs=[
            pl.BlockSpec((u_tile, B, IN), lambda g: (g, 0, 0)),    # x
            pl.BlockSpec((u_tile, IN, PP), lambda g: (g, 0, 0)),   # packed W_i
            pl.BlockSpec((u_tile, 1, PP), lambda g: (g, 0, 0)),    # packed bias (+gh_r/z)
            pl.BlockSpec((u_tile, 2, OUT), lambda g: (g, 0, 0)),   # [gh_n; h0]
        ],
        out_specs=pl.BlockSpec((u_tile, B, OUT), lambda g: (g, 0, 0)),
        compiler_params=pltpu.CompilerParams(
            dimension_semantics=("parallel",),
            vmem_limit_bytes=vmem_limit),
        cost_estimate=cost,
    )(x_um, wi, b, hc)


@jax.jit
def unit_wise_gru_forward_unit_major(x_um, packed):
    """x_um: (num_units, batch, in_features) -> (num_units, batch, out_features).

    Preferred entry point: keeps activations unit-major end-to-end and avoids the
    two HBM transpose passes of the module layout."""
    return _forward_unit_major(x_um, packed["wi"], packed["b"], packed["hc"])


@jax.jit
def unit_wise_gru_forward(x, packed):
    """Module-layout interface: x: (batch, num_units, in_features)."""
    x_um = jnp.transpose(x, (1, 0, 2))
    y_um = _forward_unit_major(x_um, packed["wi"], packed["b"], packed["hc"])
    return jnp.transpose(y_um, (1, 0, 2))


def init_params(key, num_units, in_features, out_features, dtype=jnp.float32):
    """Matches the torch init: every parameter ~ U(-sqrt(1/out), sqrt(1/out))."""
    bound = (1.0 / out_features) ** 0.5
    keys = jax.random.split(key, 13)

    def u(k, shape):
        return jax.random.uniform(k, shape, dtype=dtype, minval=-bound, maxval=bound)

    wir = u(keys[0], (num_units, in_features, out_features))
    wiz = u(keys[1], (num_units, in_features, out_features))
    win = u(keys[2], (num_units, in_features, out_features))
    whr = u(keys[3], (num_units, out_features, out_features))
    whz = u(keys[4], (num_units, out_features, out_features))
    whn = u(keys[5], (num_units, out_features, out_features))
    bir = u(keys[6], (num_units, 1, out_features))
    biz = u(keys[7], (num_units, 1, out_features))
    bin_ = u(keys[8], (num_units, 1, out_features))
    bhr = u(keys[9], (num_units, 1, out_features))
    bhz = u(keys[10], (num_units, 1, out_features))
    bhn = u(keys[11], (num_units, 1, out_features))
    hidden_init = u(keys[12], (1, num_units, out_features))

    params = (wir, wiz, win, whr, whz, whn, bir, biz, bin_, bhr, bhz, bhn)
    return params, hidden_init


def reference_forward(x, hidden_init, params):
    """Pure-JAX reference matching the PyTorch forward."""
    (wir, wiz, win, whr, whz, whn, bir, biz, bin_, bhr, bhz, bhn) = params
    B = x.shape[0]
    h = jnp.broadcast_to(hidden_init, (B,) + hidden_init.shape[1:])

    def lin(v, w, b):
        # v: (B, U, F), w: (U, F, O), b: (U, 1, O)
        return jnp.einsum('buf,ufo->buo', v, w) + jnp.transpose(b, (1, 0, 2))

    r = jax.nn.sigmoid(lin(x, wir, bir) + lin(h, whr, bhr))
    z = jax.nn.sigmoid(lin(x, wiz, biz) + lin(h, whz, bhz))
    n = jnp.tanh(lin(x, win, bin_) + r * lin(h, whn, bhn))
    return (1.0 - z) * n + z * h


if __name__ == "__main__":
    batch = 4
    num_units = 8
    in_features = 16
    out_features = 32

    key = jax.random.PRNGKey(0)
    k_x, k_p = jax.random.split(key)

    x = jax.random.normal(k_x, (batch, num_units, in_features), dtype=jnp.float32)
    params, hidden_init = init_params(k_p, num_units, in_features, out_features)
    y_ref = reference_forward(x, hidden_init, params)

    # f32 weights: tight check against the pure-JAX reference.
    packed_f32 = pack_params(params, hidden_init, weight_dtype=jnp.float32)
    y = unit_wise_gru_forward(x, packed_f32)
    y = jax.block_until_ready(y)
    assert y.shape == (batch, num_units, out_features)
    assert jnp.allclose(y, y_ref, atol=1e-5, rtol=1e-5), "f32 kernel mismatch vs reference"

    # bf16 weights + bf16 x on the MXU (f32 accumulation / f32 gate math): looser tolerance.
    packed_bf16 = pack_params(params, hidden_init, weight_dtype=jnp.bfloat16)
    y_bf16 = unit_wise_gru_forward(x, packed_bf16)
    y_bf16 = jax.block_until_ready(y_bf16)
    assert jnp.allclose(y_bf16, y_ref, atol=3e-2, rtol=3e-2), "bf16 kernel mismatch vs reference"

    # Unit-major entry point (no wrapper transposes) matches too.
    y_um = unit_wise_gru_forward_unit_major(jnp.transpose(x, (1, 0, 2)), packed_f32)
    y_um = jax.block_until_ready(y_um)
    assert jnp.allclose(jnp.transpose(y_um, (1, 0, 2)), y_ref, atol=1e-5, rtol=1e-5)

    print("KERNEL_OK")
</pallas_src>

<mosaic_0001>
module attributes {stable_mosaic.version = 11 : i64} {
  func.func @_gru_kernel(%arg0: i32, %arg1: memref<4x4x16xf32, #tpu.memory_space<vmem>>, %arg2: memref<4x16x128xf32, #tpu.memory_space<vmem>>, %arg3: memref<4x1x128xf32, #tpu.memory_space<vmem>>, %arg4: memref<4x2x32xf32, #tpu.memory_space<vmem>>, %arg5: memref<4x4x32xf32, #tpu.memory_space<vmem>>) attributes {dimension_semantics = [#tpu.dimension_semantics<parallel>], iteration_bounds = array<i64: 2>, scalar_prefetch = 0 : i64, scratch_operands = 0 : i64, tpu.core_type = #tpu.core_type<tc>, window_params = [{transform_indices = @transform_0, window_bounds = array<i64: 4, 4, 16>}, {transform_indices = @transform_1, window_bounds = array<i64: 4, 16, 128>}, {transform_indices = @transform_2, window_bounds = array<i64: 4, 1, 128>}, {transform_indices = @transform_3, window_bounds = array<i64: 4, 2, 32>}, {transform_indices = @transform_4, window_bounds = array<i64: 4, 4, 32>}]} {
    %c0_i32 = arith.constant 0 : i32
    %0 = arith.index_cast %c0_i32 : i32 to index
    %c0 = arith.constant 0 : index
    %c0_0 = arith.constant 0 : index
    %1 = vector.load %arg1[%0, %c0, %c0_0] : memref<4x4x16xf32, #tpu.memory_space<vmem>>, vector<1x4x16xf32>
    %2 = vector.shape_cast %1 : vector<1x4x16xf32> to vector<4x16xf32>
    %3 = arith.index_cast %c0_i32 : i32 to index
    %c0_1 = arith.constant 0 : index
    %c0_2 = arith.constant 0 : index
    %4 = vector.load %arg2[%3, %c0_1, %c0_2] : memref<4x16x128xf32, #tpu.memory_space<vmem>>, vector<1x16x128xf32>
    %5 = vector.shape_cast %4 : vector<1x16x128xf32> to vector<16x128xf32>
    %cst = arith.constant dense<0.000000e+00> : vector<4x128xf32>
    %6 = tpu.matmul %2, %5, %cst {dimension_numbers = #tpu.dot_dimension_numbers<[1], [0], [0], [1], [0, 0, 1, 1], [], []>} : vector<4x16xf32>, vector<16x128xf32>, vector<4x128xf32> -> vector<4x128xf32>
    %7 = arith.index_cast %c0_i32 : i32 to index
    %c0_3 = arith.constant 0 : index
    %c0_4 = arith.constant 0 : index
    %8 = vector.load %arg3[%7, %c0_3, %c0_4] : memref<4x1x128xf32, #tpu.memory_space<vmem>>, vector<1x1x128xf32>
    %9 = vector.shape_cast %8 : vector<1x1x128xf32> to vector<1x128xf32>
    %10 = vector.broadcast %9 : vector<1x128xf32> to vector<4x128xf32>
    %11 = arith.addf %6, %10 : vector<4x128xf32>
    %12 = arith.index_cast %c0_i32 : i32 to index
    %c0_5 = arith.constant 0 : index
    %c0_6 = arith.constant 0 : index
    %13 = vector.load %arg4[%12, %c0_5, %c0_6] : memref<4x2x32xf32, #tpu.memory_space<vmem>>, vector<1x2x32xf32>
    %14 = vector.shape_cast %13 : vector<1x2x32xf32> to vector<2x32xf32>
    %15 = vector.extract_strided_slice %14 {offsets = [0, 0], sizes = [1, 32], strides = [1, 1]} : vector<2x32xf32> to vector<1x32xf32>
    %16 = vector.extract_strided_slice %14 {offsets = [1, 0], sizes = [1, 32], strides = [1, 1]} : vector<2x32xf32> to vector<1x32xf32>
    %17 = vector.extract_strided_slice %11 {offsets = [0, 0], sizes = [4, 32], strides = [1, 1]} : vector<4x128xf32> to vector<4x32xf32>
    %18 = arith.negf %17 : vector<4x32xf32>
    %19 = math.exp %18 : vector<4x32xf32>
    %cst_7 = arith.constant 1.000000e+00 : f32
    %20 = vector.broadcast %cst_7 : f32 to vector<4x32xf32>
    %21 = arith.addf %20, %19 : vector<4x32xf32>
    %22 = arith.divf %20, %21 : vector<4x32xf32>
    %23 = vector.extract_strided_slice %11 {offsets = [0, 32], sizes = [4, 32], strides = [1, 1]} : vector<4x128xf32> to vector<4x32xf32>
    %24 = arith.negf %23 : vector<4x32xf32>
    %25 = math.exp %24 : vector<4x32xf32>
    %cst_8 = arith.constant 1.000000e+00 : f32
    %26 = vector.broadcast %cst_8 : f32 to vector<4x32xf32>
    %27 = arith.addf %26, %25 : vector<4x32xf32>
    %28 = arith.divf %26, %27 : vector<4x32xf32>
    %29 = vector.extract_strided_slice %11 {offsets = [0, 64], sizes = [4, 32], strides = [1, 1]} : vector<4x128xf32> to vector<4x32xf32>
    %30 = vector.broadcast %15 : vector<1x32xf32> to vector<4x32xf32>
    %31 = arith.mulf %22, %30 : vector<4x32xf32>
    %32 = arith.addf %29, %31 : vector<4x32xf32>
    %33 = math.tanh %32 : vector<4x32xf32>
    %34 = vector.broadcast %16 : vector<1x32xf32> to vector<4x32xf32>
    %35 = arith.subf %34, %33 : vector<4x32xf32>
    %36 = arith.mulf %28, %35 : vector<4x32xf32>
    %37 = arith.addf %33, %36 : vector<4x32xf32>
    %38 = arith.index_cast %c0_i32 : i32 to index
    %c0_9 = arith.constant 0 : index
    %c0_10 = arith.constant 0 : index
    %39 = vector.load %arg5[%38, %c0_9, %c0_10] : memref<4x4x32xf32, #tpu.memory_space<vmem>>, vector<1x4x32xf32>
    %40 = vector.shape_cast %39 : vector<1x4x32xf32> to vector<4x32xf32>
    %41 = vector.shape_cast %37 : vector<4x32xf32> to vector<1x4x32xf32>
    tpu.vector_store %arg5[%38, %c0_9, %c0_10], %41 {strides = array<i32>} : memref<4x4x32xf32, #tpu.memory_space<vmem>>, vector<1x4x32xf32>,
    %c1_i32 = arith.constant 1 : i32
    %42 = arith.index_cast %c1_i32 : i32 to index
    %c0_11 = arith.constant 0 : index
    %c0_12 = arith.constant 0 : index
    %43 = vector.load %arg1[%42, %c0_11, %c0_12] : memref<4x4x16xf32, #tpu.memory_space<vmem>>, vector<1x4x16xf32>
    %44 = vector.shape_cast %43 : vector<1x4x16xf32> to vector<4x16xf32>
    %45 = arith.index_cast %c1_i32 : i32 to index
    %c0_13 = arith.constant 0 : index
    %c0_14 = arith.constant 0 : index
    %46 = vector.load %arg2[%45, %c0_13, %c0_14] : memref<4x16x128xf32, #tpu.memory_space<vmem>>, vector<1x16x128xf32>
    %47 = vector.shape_cast %46 : vector<1x16x128xf32> to vector<16x128xf32>
    %cst_15 = arith.constant dense<0.000000e+00> : vector<4x128xf32>
    %48 = tpu.matmul %44, %47, %cst_15 {dimension_numbers = #tpu.dot_dimension_numbers<[1], [0], [0], [1], [0, 0, 1, 1], [], []>} : vector<4x16xf32>, vector<16x128xf32>, vector<4x128xf32> -> vector<4x128xf32>
    %49 = arith.index_cast %c1_i32 : i32 to index
    %c0_16 = arith.constant 0 : index
    %c0_17 = arith.constant 0 : index
    %50 = vector.load %arg3[%49, %c0_16, %c0_17] : memref<4x1x128xf32, #tpu.memory_space<vmem>>, vector<1x1x128xf32>
    %51 = vector.shape_cast %50 : vector<1x1x128xf32> to vector<1x128xf32>
    %52 = vector.broadcast %51 : vector<1x128xf32> to vector<4x128xf32>
    %53 = arith.addf %48, %52 : vector<4x128xf32>
    %54 = arith.index_cast %c1_i32 : i32 to index
    %c0_18 = arith.constant 0 : index
    %c0_19 = arith.constant 0 : index
    %55 = vector.load %arg4[%54, %c0_18, %c0_19] : memref<4x2x32xf32, #tpu.memory_space<vmem>>, vector<1x2x32xf32>
    %56 = vector.shape_cast %55 : vector<1x2x32xf32> to vector<2x32xf32>
    %57 = vector.extract_strided_slice %56 {offsets = [0, 0], sizes = [1, 32], strides = [1, 1]} : vector<2x32xf32> to vector<1x32xf32>
    %58 = vector.extract_strided_slice %56 {offsets = [1, 0], sizes = [1, 32], strides = [1, 1]} : vector<2x32xf32> to vector<1x32xf32>
    %59 = vector.extract_strided_slice %53 {offsets = [0, 0], sizes = [4, 32], strides = [1, 1]} : vector<4x128xf32> to vector<4x32xf32>
    %60 = arith.negf %59 : vector<4x32xf32>
    %61 = math.exp %60 : vector<4x32xf32>
    %cst_20 = arith.constant 1.000000e+00 : f32
    %62 = vector.broadcast %cst_20 : f32 to vector<4x32xf32>
    %63 = arith.addf %62, %61 : vector<4x32xf32>
    %64 = arith.divf %62, %63 : vector<4x32xf32>
    %65 = vector.extract_strided_slice %53 {offsets = [0, 32], sizes = [4, 32], strides = [1, 1]} : vector<4x128xf32> to vector<4x32xf32>
    %66 = arith.negf %65 : vector<4x32xf32>
    %67 = math.exp %66 : vector<4x32xf32>
    %cst_21 = arith.constant 1.000000e+00 : f32
    %68 = vector.broadcast %cst_21 : f32 to vector<4x32xf32>
    %69 = arith.addf %68, %67 : vector<4x32xf32>
    %70 = arith.divf %68, %69 : vector<4x32xf32>
    %71 = vector.extract_strided_slice %53 {offsets = [0, 64], sizes = [4, 32], strides = [1, 1]} : vector<4x128xf32> to vector<4x32xf32>
    %72 = vector.broadcast %57 : vector<1x32xf32> to vector<4x32xf32>
    %73 = arith.mulf %64, %72 : vector<4x32xf32>
    %74 = arith.addf %71, %73 : vector<4x32xf32>
    %75 = math.tanh %74 : vector<4x32xf32>
    %76 = vector.broadcast %58 : vector<1x32xf32> to vector<4x32xf32>
    %77 = arith.subf %76, %75 : vector<4x32xf32>
    %78 = arith.mulf %70, %77 : vector<4x32xf32>
    %79 = arith.addf %75, %78 : vector<4x32xf32>
    %80 = arith.index_cast %c1_i32 : i32 to index
    %c0_22 = arith.constant 0 : index
    %c0_23 = arith.constant 0 : index
    %81 = vector.load %arg5[%80, %c0_22, %c0_23] : memref<4x4x32xf32, #tpu.memory_space<vmem>>, vector<1x4x32xf32>
    %82 = vector.shape_cast %81 : vector<1x4x32xf32> to vector<4x32xf32>
    %83 = vector.shape_cast %79 : vector<4x32xf32> to vector<1x4x32xf32>
    tpu.vector_store %arg5[%80, %c0_22, %c0_23], %83 {strides = array<i32>} : memref<4x4x32xf32, #tpu.memory_space<vmem>>, vector<1x4x32xf32>,
    %c2_i32 = arith.constant 2 : i32
    %84 = arith.index_cast %c2_i32 : i32 to index
    %c0_24 = arith.constant 0 : index
    %c0_25 = arith.constant 0 : index
    %85 = vector.load %arg1[%84, %c0_24, %c0_25] : memref<4x4x16xf32, #tpu.memory_space<vmem>>, vector<1x4x16xf32>
    %86 = vector.shape_cast %85 : vector<1x4x16xf32> to vector<4x16xf32>
    %87 = arith.index_cast %c2_i32 : i32 to index
    %c0_26 = arith.constant 0 : index
    %c0_27 = arith.constant 0 : index
    %88 = vector.load %arg2[%87, %c0_26, %c0_27] : memref<4x16x128xf32, #tpu.memory_space<vmem>>, vector<1x16x128xf32>
    %89 = vector.shape_cast %88 : vector<1x16x128xf32> to vector<16x128xf32>
    %cst_28 = arith.constant dense<0.000000e+00> : vector<4x128xf32>
    %90 = tpu.matmul %86, %89, %cst_28 {dimension_numbers = #tpu.dot_dimension_numbers<[1], [0], [0], [1], [0, 0, 1, 1], [], []>} : vector<4x16xf32>, vector<16x128xf32>, vector<4x128xf32> -> vector<4x128xf32>
    %91 = arith.index_cast %c2_i32 : i32 to index
    %c0_29 = arith.constant 0 : index
    %c0_30 = arith.constant 0 : index
    %92 = vector.load %arg3[%91, %c0_29, %c0_30] : memref<4x1x128xf32, #tpu.memory_space<vmem>>, vector<1x1x128xf32>
    %93 = vector.shape_cast %92 : vector<1x1x128xf32> to vector<1x128xf32>
    %94 = vector.broadcast %93 : vector<1x128xf32> to vector<4x128xf32>
    %95 = arith.addf %90, %94 : vector<4x128xf32>
    %96 = arith.index_cast %c2_i32 : i32 to index
    %c0_31 = arith.constant 0 : index
    %c0_32 = arith.constant 0 : index
    %97 = vector.load %arg4[%96, %c0_31, %c0_32] : memref<4x2x32xf32, #tpu.memory_space<vmem>>, vector<1x2x32xf32>
    %98 = vector.shape_cast %97 : vector<1x2x32xf32> to vector<2x32xf32>
    %99 = vector.extract_strided_slice %98 {offsets = [0, 0], sizes = [1, 32], strides = [1, 1]} : vector<2x32xf32> to vector<1x32xf32>
    %100 = vector.extract_strided_slice %98 {offsets = [1, 0], sizes = [1, 32], strides = [1, 1]} : vector<2x32xf32> to vector<1x32xf32>
    %101 = vector.extract_strided_slice %95 {offsets = [0, 0], sizes = [4, 32], strides = [1, 1]} : vector<4x128xf32> to vector<4x32xf32>
    %102 = arith.negf %101 : vector<4x32xf32>
    %103 = math.exp %102 : vector<4x32xf32>
    %cst_33 = arith.constant 1.000000e+00 : f32
    %104 = vector.broadcast %cst_33 : f32 to vector<4x32xf32>
    %105 = arith.addf %104, %103 : vector<4x32xf32>
    %106 = arith.divf %104, %105 : vector<4x32xf32>
    %107 = vector.extract_strided_slice %95 {offsets = [0, 32], sizes = [4, 32], strides = [1, 1]} : vector<4x128xf32> to vector<4x32xf32>
    %108 = arith.negf %107 : vector<4x32xf32>
    %109 = math.exp %108 : vector<4x32xf32>
    %cst_34 = arith.constant 1.000000e+00 : f32
    %110 = vector.broadcast %cst_34 : f32 to vector<4x32xf32>
    %111 = arith.addf %110, %109 : vector<4x32xf32>
    %112 = arith.divf %110, %111 : vector<4x32xf32>
    %113 = vector.extract_strided_slice %95 {offsets = [0, 64], sizes = [4, 32], strides = [1, 1]} : vector<4x128xf32> to vector<4x32xf32>
    %114 = vector.broadcast %99 : vector<1x32xf32> to vector<4x32xf32>
    %115 = arith.mulf %106, %114 : vector<4x32xf32>
    %116 = arith.addf %113, %115 : vector<4x32xf32>
    %117 = math.tanh %116 : vector<4x32xf32>
    %118 = vector.broadcast %100 : vector<1x32xf32> to vector<4x32xf32>
    %119 = arith.subf %118, %117 : vector<4x32xf32>
    %120 = arith.mulf %112, %119 : vector<4x32xf32>
    %121 = arith.addf %117, %120 : vector<4x32xf32>
    %122 = arith.index_cast %c2_i32 : i32 to index
    %c0_35 = arith.constant 0 : index
    %c0_36 = arith.constant 0 : index
    %123 = vector.load %arg5[%122, %c0_35, %c0_36] : memref<4x4x32xf32, #tpu.memory_space<vmem>>, vector<1x4x32xf32>
    %124 = vector.shape_cast %123 : vector<1x4x32xf32> to vector<4x32xf32>
    %125 = vector.shape_cast %121 : vector<4x32xf32> to vector<1x4x32xf32>
    tpu.vector_store %arg5[%122, %c0_35, %c0_36], %125 {strides = array<i32>} : memref<4x4x32xf32, #tpu.memory_space<vmem>>, vector<1x4x32xf32>,
    %c3_i32 = arith.constant 3 : i32
    %126 = arith.index_cast %c3_i32 : i32 to index
    %c0_37 = arith.constant 0 : index
    %c0_38 = arith.constant 0 : index
    %127 = vector.load %arg1[%126, %c0_37, %c0_38] : memref<4x4x16xf32, #tpu.memory_space<vmem>>, vector<1x4x16xf32>
    %128 = vector.shape_cast %127 : vector<1x4x16xf32> to vector<4x16xf32>
    %129 = arith.index_cast %c3_i32 : i32 to index
    %c0_39 = arith.constant 0 : index
    %c0_40 = arith.constant 0 : index
    %130 = vector.load %arg2[%129, %c0_39, %c0_40] : memref<4x16x128xf32, #tpu.memory_space<vmem>>, vector<1x16x128xf32>
    %131 = vector.shape_cast %130 : vector<1x16x128xf32> to vector<16x128xf32>
    %cst_41 = arith.constant dense<0.000000e+00> : vector<4x128xf32>
    %132 = tpu.matmul %128, %131, %cst_41 {dimension_numbers = #tpu.dot_dimension_numbers<[1], [0], [0], [1], [0, 0, 1, 1], [], []>} : vector<4x16xf32>, vector<16x128xf32>, vector<4x128xf32> -> vector<4x128xf32>
    %133 = arith.index_cast %c3_i32 : i32 to index
    %c0_42 = arith.constant 0 : index
    %c0_43 = arith.constant 0 : index
    %134 = vector.load %arg3[%133, %c0_42, %c0_43] : memref<4x1x128xf32, #tpu.memory_space<vmem>>, vector<1x1x128xf32>
    %135 = vector.shape_cast %134 : vector<1x1x128xf32> to vector<1x128xf32>
    %136 = vector.broadcast %135 : vector<1x128xf32> to vector<4x128xf32>
    %137 = arith.addf %132, %136 : vector<4x128xf32>
    %138 = arith.index_cast %c3_i32 : i32 to index
    %c0_44 = arith.constant 0 : index
    %c0_45 = arith.constant 0 : index
    %139 = vector.load %arg4[%138, %c0_44, %c0_45] : memref<4x2x32xf32, #tpu.memory_space<vmem>>, vector<1x2x32xf32>
    %140 = vector.shape_cast %139 : vector<1x2x32xf32> to vector<2x32xf32>
    %141 = vector.extract_strided_slice %140 {offsets = [0, 0], sizes = [1, 32], strides = [1, 1]} : vector<2x32xf32> to vector<1x32xf32>
    %142 = vector.extract_strided_slice %140 {offsets = [1, 0], sizes = [1, 32], strides = [1, 1]} : vector<2x32xf32> to vector<1x32xf32>
    %143 = vector.extract_strided_slice %137 {offsets = [0, 0], sizes = [4, 32], strides = [1, 1]} : vector<4x128xf32> to vector<4x32xf32>
    %144 = arith.negf %143 : vector<4x32xf32>
    %145 = math.exp %144 : vector<4x32xf32>
    %cst_46 = arith.constant 1.000000e+00 : f32
    %146 = vector.broadcast %cst_46 : f32 to vector<4x32xf32>
    %147 = arith.addf %146, %145 : vector<4x32xf32>
    %148 = arith.divf %146, %147 : vector<4x32xf32>
    %149 = vector.extract_strided_slice %137 {offsets = [0, 32], sizes = [4, 32], strides = [1, 1]} : vector<4x128xf32> to vector<4x32xf32>
    %150 = arith.negf %149 : vector<4x32xf32>
    %151 = math.exp %150 : vector<4x32xf32>
    %cst_47 = arith.constant 1.000000e+00 : f32
    %152 = vector.broadcast %cst_47 : f32 to vector<4x32xf32>
    %153 = arith.addf %152, %151 : vector<4x32xf32>
    %154 = arith.divf %152, %153 : vector<4x32xf32>
    %155 = vector.extract_strided_slice %137 {offsets = [0, 64], sizes = [4, 32], strides = [1, 1]} : vector<4x128xf32> to vector<4x32xf32>
    %156 = vector.broadcast %141 : vector<1x32xf32> to vector<4x32xf32>
    %157 = arith.mulf %148, %156 : vector<4x32xf32>
    %158 = arith.addf %155, %157 : vector<4x32xf32>
    %159 = math.tanh %158 : vector<4x32xf32>
    %160 = vector.broadcast %142 : vector<1x32xf32> to vector<4x32xf32>
    %161 = arith.subf %160, %159 : vector<4x32xf32>
    %162 = arith.mulf %154, %161 : vector<4x32xf32>
    %163 = arith.addf %159, %162 : vector<4x32xf32>
    %164 = arith.index_cast %c3_i32 : i32 to index
    %c0_48 = arith.constant 0 : index
    %c0_49 = arith.constant 0 : index
    %165 = vector.load %arg5[%164, %c0_48, %c0_49] : memref<4x4x32xf32, #tpu.memory_space<vmem>>, vector<1x4x32xf32>
    %166 = vector.shape_cast %165 : vector<1x4x32xf32> to vector<4x32xf32>
    %167 = vector.shape_cast %163 : vector<4x32xf32> to vector<1x4x32xf32>
    tpu.vector_store %arg5[%164, %c0_48, %c0_49], %167 {strides = array<i32>} : memref<4x4x32xf32, #tpu.memory_space<vmem>>, vector<1x4x32xf32>,
    %c4_i32 = arith.constant 4 : i32
    return
  }
  func.func @transform_0(%arg0: i32) -> (i32, i32, i32) {
    %c0_i32 = arith.constant 0 : i32
    %c0_i32_0 = arith.constant 0 : i32
    %c0_i32_1 = arith.constant 0 : i32
    return %arg0, %c0_i32, %c0_i32_0 : i32, i32, i32
  }
  func.func @transform_1(%arg0: i32) -> (i32, i32, i32) {
    %c0_i32 = arith.constant 0 : i32
    %c0_i32_0 = arith.constant 0 : i32
    %c0_i32_1 = arith.constant 0 : i32
    return %arg0, %c0_i32, %c0_i32_0 : i32, i32, i32
  }
  func.func @transform_2(%arg0: i32) -> (i32, i32, i32) {
    %c0_i32 = arith.constant 0 : i32
    %c0_i32_0 = arith.constant 0 : i32
    %c0_i32_1 = arith.constant 0 : i32
    return %arg0, %c0_i32, %c0_i32_0 : i32, i32, i32
  }
  func.func @transform_3(%arg0: i32) -> (i32, i32, i32) {
    %c0_i32 = arith.constant 0 : i32
    %c0_i32_0 = arith.constant 0 : i32
    %c0_i32_1 = arith.constant 0 : i32
    return %arg0, %c0_i32, %c0_i32_0 : i32, i32, i32
  }
  func.func @transform_4(%arg0: i32) -> (i32, i32, i32) {
    %c0_i32 = arith.constant 0 : i32
    %c0_i32_0 = arith.constant 0 : i32
    %c0_i32_1 = arith.constant 0 : i32
    return %arg0, %c0_i32, %c0_i32_0 : i32, i32, i32
  }
}

</mosaic_0001>

<llo_original>
// kernel: unit_wise_gru_forward.1
$region0: #{unit_wise_gru_forward.1}
  #allocation0 [shape = 'u32[]', space=smem, size = 0x4, offset = 0x4, fixed_abs, tag = 'smem constant byte address 0x4 - core index']
  #allocation1 [shape = 'u32[144,128]{1,0:T(1,128)}', space=vmem, size = 0x12000, scoped, tag = 'internal scratch']
  %s0 = inlined_call_operand.vmem [shape: f32[8,4,16], index: 0, kind: input, shape index: {}]
  %s1 = inlined_call_operand.hbm [shape: f32[8,16,128], index: 1, kind: input, shape index: {}]
  %s2 = inlined_call_operand.vmem [shape: f32[8,1,128], index: 2, kind: input, shape index: {}]
  %s3 = inlined_call_operand.vmem [shape: f32[8,2,32], index: 3, kind: input, shape index: {}]
  %s4 = inlined_call_operand.vmem [shape: f32[8,4,32], index: 4, kind: output, shape index: {}]
  %s5 = sld [smem:[#allocation0]]
  $region53: #{unit_wise_gru_forward.1} parent=0
    _
  %s7 = ssub.s32 1, %s5
  %s8 = scalar_select 0, %s7, %s5
  $region1: #{unit_wise_gru_forward.1} parent=0
    #allocation2 [shape = 'u8[65536]{0}', space=vmem, size = 0x10000, scoped, tag = 'input window, operand 1']
    #allocation3 [shape = 's32[2]{0}', space=sflag, size = 0x8, scoped, tag = 'scoped memory for unit_wise_gru_forward.1']
    %9 = vsyncpa [#allocation3], 0
    %s10 = scalar_lea.sflag [#allocation3], 1
    %11 = vsyncpa %s10, 0
    loop: start=0, step=1, limit=4
    $region2: #{unit_wise_gru_forward.1} parent=1 // loop_pre_header
      _
    $region3: #{unit_wise_gru_forward.1} parent=1 // loop_header
      %s13 = sphi 0, %s17
      %p14 = scmp.ge.s32.totalorder %s13, 4
      %s23 = sphi 0, %s25
      %s26 = sphi 0, %s23
      %s27 = sphi 0, %s26
      %s43 = sphi 0, %s27
      %s49 = sphi 0, %s51
      %s52 = sphi 0, %s49
      %s53 = sphi 0, %s52
      %s69 = sphi 0, %s53
      %s75 = sphi 0, %s77
      %s78 = sphi 0, %s75
      %s79 = sphi 0, %s78
      %s95 = sphi 0, %s79
      %s101 = sphi 0, %s103
      %s104 = sphi 0, %s101
      %s105 = sphi 0, %s104
      %s121 = sphi 0, %s105
      %s127 = sphi 0, %s129
      %s130 = sphi 0, %s127
      %s131 = sphi 0, %s130
      %s147 = sphi 0, %s131
    $region4: #{unit_wise_gru_forward.1} parent=1 // loop_header_branch
      %16 = sbr.rel (%p14) target = $region8
    $region5: #{unit_wise_gru_forward.1} parent=1 // loop_body
      %s18 = ssub.s32 %s13, 1
      %s19 = ssub.s32 %s13, 2
      %s20 = sadd.s32 %s13, 1
      %s21 = ssub.s32 %s13, %s20
      %p22 = scmp.eq.s32.totalorder %s21, 0
      %s24 = sadd.s32 %s23, 1
      %s25 = scalar_select %p22, %s23, %s24
      %p28 = pneg %p22
      %p29 = scmp.eq.s32.totalorder %s13, 1
      %p30 = por %p28, %p29
      %p31 = scmp.ne.s32.totalorder %s23, %s26
      %p32 = scmp.eq.s32.totalorder %s13, 0
      %p33 = por %p31, %p32
      %p34 = scmp.ne.s32.totalorder %s23, %s26
      %p35 = scmp.eq.s32.totalorder %s18, 1
      %p36 = por %p34, %p35
      %p37 = scmp.ne.s32.totalorder %s26, %s27
      %p38 = scmp.eq.s32.totalorder %s18, 0
      %p39 = por %p37, %p38
      %p40 = scmp.ne.s32.totalorder %s26, %s27
      %p41 = scmp.eq.s32.totalorder %s19, 1
      %p42 = por %p40, %p41
      %p44 = scmp.ne.s32.totalorder %s27, %s43
      %p45 = scmp.eq.s32.totalorder %s19, 0
      %p46 = por %p44, %p45
      %s47 = ssub.s32 %s13, %s20
      %p48 = scmp.eq.s32.totalorder %s47, 0
      %s50 = sadd.s32 %s49, 1
      %s51 = scalar_select %p48, %s49, %s50
      %p54 = pneg %p48
      %p55 = scmp.eq.s32.totalorder %s13, 1
      %p56 = por %p54, %p55
      %p57 = scmp.ne.s32.totalorder %s49, %s52
      %p58 = scmp.eq.s32.totalorder %s13, 0
      %p59 = por %p57, %p58
      %p60 = scmp.ne.s32.totalorder %s49, %s52
      %p61 = scmp.eq.s32.totalorder %s18, 1
      %p62 = por %p60, %p61
      %p63 = scmp.ne.s32.totalorder %s52, %s53
      %p64 = scmp.eq.s32.totalorder %s18, 0
      %p65 = por %p63, %p64
      %p66 = scmp.ne.s32.totalorder %s52, %s53
      %p67 = scmp.eq.s32.totalorder %s19, 1
      %p68 = por %p66, %p67
      %p70 = scmp.ne.s32.totalorder %s53, %s69
      %p71 = scmp.eq.s32.totalorder %s19, 0
      %p72 = por %p70, %p71
      %s73 = ssub.s32 %s13, %s20
      %p74 = scmp.eq.s32.totalorder %s73, 0
      %s76 = sadd.s32 %s75, 1
      %s77 = scalar_select %p74, %s75, %s76
      %p80 = pneg %p74
      %p81 = scmp.eq.s32.totalorder %s13, 1
      %p82 = por %p80, %p81
      %p83 = scmp.ne.s32.totalorder %s75, %s78
      %p84 = scmp.eq.s32.totalorder %s13, 0
      %p85 = por %p83, %p84
      %p86 = scmp.ne.s32.totalorder %s75, %s78
      %p87 = scmp.eq.s32.totalorder %s18, 1
      %p88 = por %p86, %p87
      %p89 = scmp.ne.s32.totalorder %s78, %s79
      %p90 = scmp.eq.s32.totalorder %s18, 0
      %p91 = por %p89, %p90
      %p92 = scmp.ne.s32.totalorder %s78, %s79
      %p93 = scmp.eq.s32.totalorder %s19, 1
      %p94 = por %p92, %p93
      %p96 = scmp.ne.s32.totalorder %s79, %s95
      %p97 = scmp.eq.s32.totalorder %s19, 0
      %p98 = por %p96, %p97
      %s99 = ssub.s32 %s13, %s20
      %p100 = scmp.eq.s32.totalorder %s99, 0
      %s102 = sadd.s32 %s101, 1
      %s103 = scalar_select %p100, %s101, %s102
      %p106 = pneg %p100
      %p107 = scmp.eq.s32.totalorder %s13, 1
      %p108 = por %p106, %p107
      %p109 = scmp.ne.s32.totalorder %s101, %s104
      %p110 = scmp.eq.s32.totalorder %s13, 0
      %p111 = por %p109, %p110
      %p112 = scmp.ne.s32.totalorder %s101, %s104
      %p113 = scmp.eq.s32.totalorder %s18, 1
      %p114 = por %p112, %p113
      %p115 = scmp.ne.s32.totalorder %s104, %s105
      %p116 = scmp.eq.s32.totalorder %s18, 0
      %p117 = por %p115, %p116
      %p118 = scmp.ne.s32.totalorder %s104, %s105
      %p119 = scmp.eq.s32.totalorder %s19, 1
      %p120 = por %p118, %p119
      %p122 = scmp.ne.s32.totalorder %s105, %s121
      %p123 = scmp.eq.s32.totalorder %s19, 0
      %p124 = por %p122, %p123
      %s125 = ssub.s32 %s13, %s20
      %p126 = scmp.eq.s32.totalorder %s125, 0
      %s128 = sadd.s32 %s127, 1
      %s129 = scalar_select %p126, %s127, %s128
      %p132 = pneg %p126
      %p133 = scmp.eq.s32.totalorder %s13, 1
      %p134 = por %p132, %p133
      %p135 = scmp.ne.s32.totalorder %s127, %s130
      %p136 = scmp.eq.s32.totalorder %s13, 0
      %p137 = por %p135, %p136
      %p138 = scmp.ne.s32.totalorder %s127, %s130
      %p139 = scmp.eq.s32.totalorder %s18, 1
      %p140 = por %p138, %p139
      %p141 = scmp.ne.s32.totalorder %s130, %s131
      %p142 = scmp.eq.s32.totalorder %s18, 0
      %p143 = por %p141, %p142
      %p144 = scmp.ne.s32.totalorder %s130, %s131
      %p145 = scmp.eq.s32.totalorder %s19, 1
      %p146 = por %p144, %p145
      %p148 = scmp.ne.s32.totalorder %s131, %s147
      %p149 = scmp.eq.s32.totalorder %s19, 0
      %p150 = por %p148, %p149
      %p151 = scmp.le.s32.totalorder 1, %s13
      %p152 = scmp.lt.s32.totalorder %s13, 3
      %p153 = pnand %p151, %p152
      %p154 = pneg %p153
      // Predicated region
      $region9: #{unit_wise_gru_forward.1} parent=5 // pred_check
        _
      $region10: #{unit_wise_gru_forward.1} parent=5 // pred_check_branch
        %156 = sbr.rel (%p153) target = $region12
      $region11: #{unit_wise_gru_forward.1} parent=5 // pred_region
        %s157 = ssub.s32 %s13, 1
      $region12: #{unit_wise_gru_forward.1} parent=5 // pred_fallthru
        _
      %p158 = scmp.lt.s32.totalorder %s13, 2
      // Predicated region
      $region13: #{unit_wise_gru_forward.1} parent=5 // pred_check
        %p159 = pneg %p158
      $region14: #{unit_wise_gru_forward.1} parent=5 // pred_check_branch
        %161 = sbr.rel (%p159) target = $region16
      $region15: #{unit_wise_gru_forward.1} parent=5 // pred_region
        // Predicated region
        $region17: #{unit_wise_gru_forward.1} parent=15 // pred_check
          %p162 = pneg %p33
        $region18: #{unit_wise_gru_forward.1} parent=15 // pred_check_branch
          %164 = sbr.rel (%p162) target = $region20
        $region19: #{unit_wise_gru_forward.1} parent=15 // pred_region
          %s165 = smul.u32 4, %s13
          %p166 = scmp.lt.s32.totalorder %s165, 7
          %s167 = scalar_select %p166, %s165, 7
          %s168 = smul.addr %s167, 4
          %s169 = scalar_lea.vmem %s0, %s168
          %s170 = smul.u32 4, %s13
        $region20: #{unit_wise_gru_forward.1} parent=15 // pred_fallthru
          _
        // Predicated region
        $region21: #{unit_wise_gru_forward.1} parent=15 // pred_check
          %p171 = pneg %p59
        $region22: #{unit_wise_gru_forward.1} parent=15 // pred_check_branch
          %173 = sbr.rel (%p171) target = $region24
        $region23: #{unit_wise_gru_forward.1} parent=15 // pred_region
          %s174 = sand.u32 %s49, 1
          %s175 = scalar_lea.sflag [#allocation3], %s174
          %s176 = sand.u32 %s49, 1
          %s177 = smul.addr %s176, 64
          %s178 = scalar_lea.vmem [#allocation2], %s177
          %s179 = smul.u32 4, %s13
          %s181 = ssub.s32 1024, 1024
          %182 = vsyncadd %s175, %s181
          %s183 = smul.addr %s179, 2
          %s184 = smul.addr %s183, 128
          %s185 = scalar_lea.hbm %s1, %s184
          %s186 = sshll.u32 %s178, 4
          %s187 = int_to_ptr.vmem [resolvable:$true] %s186
          %192 = dma.hbm_to_vmem [thread:$0]  %s185, 1024, %s187, %s175, 128, 128, 8
        $region24: #{unit_wise_gru_forward.1} parent=15 // pred_fallthru
          _
        // Predicated region
        $region25: #{unit_wise_gru_forward.1} parent=15 // pred_check
          %p193 = pneg %p85
        $region26: #{unit_wise_gru_forward.1} parent=15 // pred_check_branch
          %195 = sbr.rel (%p193) target = $region28
        $region27: #{unit_wise_gru_forward.1} parent=15 // pred_region
          %s196 = smul.u32 4, %s13
          %p197 = scmp.lt.s32.totalorder %s196, 7
          %s198 = scalar_select %p197, %s196, 7
          %s199 = scalar_lea.vmem %s2, %s198
          %s200 = smul.u32 4, %s13
        $region28: #{unit_wise_gru_forward.1} parent=15 // pred_fallthru
          _
        // Predicated region
        $region29: #{unit_wise_gru_forward.1} parent=15 // pred_check
          %p201 = pneg %p111
        $region30: #{unit_wise_gru_forward.1} parent=15 // pred_check_branch
          %203 = sbr.rel (%p201) target = $region32
        $region31: #{unit_wise_gru_forward.1} parent=15 // pred_region
          %s204 = smul.u32 4, %s13
          %p205 = scmp.lt.s32.totalorder %s204, 7
          %s206 = scalar_select %p205, %s204, 7
          %s207 = smul.addr %s206, 2
          %s208 = scalar_lea.vmem %s3, %s207
          %s209 = smul.u32 4, %s13
        $region32: #{unit_wise_gru_forward.1} parent=15 // pred_fallthru
          _
      $region16: #{unit_wise_gru_forward.1} parent=5 // pred_fallthru
        _
      %p210 = scmp.le.s32.totalorder 1, %s13
      %p211 = scmp.lt.s32.totalorder %s13, 3
      %p212 = pnand %p210, %p211
      %p213 = pneg %p212
      // Predicated region
      $region33: #{unit_wise_gru_forward.1} parent=5 // pred_check
        _
      $region34: #{unit_wise_gru_forward.1} parent=5 // pred_check_branch
        %215 = sbr.rel (%p212) target = $region36
      $region35: #{unit_wise_gru_forward.1} parent=5 // pred_region
        %s216 = ssub.s32 %s13, 1
        %s217 = sand.u32 %s52, 1
        %s218 = scalar_lea.sflag [#allocation3], %s217
        %s219 = sand.u32 %s52, 1
        %s220 = smul.addr %s219, 64
        %s221 = scalar_lea.vmem [#allocation2], %s220
        // Predicated region
        $region37: #{unit_wise_gru_forward.1} parent=35 // pred_check
          %p222 = pneg %p65
        $region38: #{unit_wise_gru_forward.1} parent=35 // pred_check_branch
          %224 = sbr.rel (%p222) target = $region40
        $region39: #{unit_wise_gru_forward.1} parent=35 // pred_region
          %225 = dma.done %s218, 1024
        $region40: #{unit_wise_gru_forward.1} parent=35 // pred_fallthru
          _
        %s226 = smul.u32 4, %s18
        %p227 = scmp.lt.s32.totalorder %s226, 7
        %s228 = scalar_select %p227, %s226, 7
        %s229 = smul.addr %s228, 4
        %s230 = scalar_lea.vmem %s0, %s229
        %p231 = pneg %p39
        %p232 = pneg %p36
        %s233 = sand.u32 %s52, 1
        %s234 = scalar_lea.sflag [#allocation3], %s233
        %s235 = sand.u32 %s52, 1
        %s236 = smul.addr %s235, 64
        %s237 = scalar_lea.vmem [#allocation2], %s236
        %p238 = pneg %p65
        %p239 = pneg %p62
        %s240 = smul.u32 4, %s18
        %p241 = scmp.lt.s32.totalorder %s240, 7
        %s242 = scalar_select %p241, %s240, 7
        %s243 = scalar_lea.vmem %s2, %s242
        %p244 = pneg %p91
        %p245 = pneg %p88
        %s246 = smul.u32 4, %s18
        %p247 = scmp.lt.s32.totalorder %s246, 7
        %s248 = scalar_select %p247, %s246, 7
        %s249 = smul.addr %s248, 2
        %s250 = scalar_lea.vmem %s3, %s249
        %p251 = pneg %p117
        %p252 = pneg %p114
        %p253 = pneg %p143
        %p254 = pneg %p140
        %s255 = smul.u32 4, %s18
        %p256 = scmp.lt.s32.totalorder %s255, 7
        %s257 = scalar_select %p256, %s255, 7
        %s258 = smul.addr %s257, 4
        %s259 = scalar_lea.vmem %s4, %s258
        %s260 = smul.u32 4, %s18
        %p261 = scmp.lt.s32.totalorder %s260, 7
        %s262 = scalar_select %p261, %s260, 7
        %s263 = smul.addr %s262, 4
        %s264 = scalar_lea.vmem %s0, %s263
        %s265 = smul.u32 4, %s18
        %s266 = smul.u32 4, %s18
        %s267 = smul.u32 4, %s18
        %p268 = scmp.lt.s32.totalorder %s267, 7
        %s269 = scalar_select %p268, %s267, 7
        %s270 = scalar_lea.vmem %s2, %s269
        %s271 = smul.u32 4, %s18
        %s272 = smul.u32 4, %s18
        %p273 = scmp.lt.s32.totalorder %s272, 7
        %s274 = scalar_select %p273, %s272, 7
        %s275 = smul.addr %s274, 2
        %s276 = scalar_lea.vmem %s3, %s275
        %s277 = smul.u32 4, %s18
        %s278 = smul.u32 4, %s18
        %p279 = scmp.lt.s32.totalorder %s278, 7
        %s280 = scalar_select %p279, %s278, 7
        %s281 = smul.addr %s280, 4
        %s282 = scalar_lea.vmem %s4, %s281
        %s283 = smul.u32 4, %s18
        %v284 = vld [vmem:[%s264] sm:$0xf]
        %v285 = vld [vmem:[%s221] sm:$0xff]
        %v286 = vld [vmem:[%s221 + $0x8] sm:$0xff]
        %v287 = vld [vmem:[%s270] sm:$0x1]
        %v289 = vlaneseq
        %v290 = vshrl.u32 %v289, 7
        %v291 = vsub.s32 0, %v290
        %v292 = vrot.slane %v287, %v291
        %vm294 = vcmask 130048
        %v296 = vsel %vm294, %v284, 0
        %298 = vmatprep.subr.mxu0 0.0
        %299 = vmatpush1.msra.mxu0 %v285
        %300 = vmatprep.subr.mxu0 0.0
        %301 = vmatpush1.msra.mxu0 %v286
        %302 = vmatprep.subr.mxu0 0.0
        %303 = vmatpush1.msra.mxu0 0.0
        %304 = vmatprep.subr.mxu0 0.0
        %305 = vmatpush1.msra.mxu0 0.0
        %306 = vmatprep.subr.mxu0 0.0
        %307 = vmatpush1.msra.mxu0 0.0
        %308 = vmatprep.subr.mxu0 0.0
        %309 = vmatpush1.msra.mxu0 0.0
        %310 = vmatprep.subr.mxu0 0.0
        %311 = vmatpush1.msra.mxu0 0.0
        %312 = vmatprep.subr.mxu0 0.0
        %313 = vmatpush1.msra.mxu0 0.0
        %314 = vmatprep.subr.mxu0 0.0
        %315 = vmatpush1.msra.mxu0 0.0
        %316 = vmatprep.subr.mxu0 0.0
        %317 = vmatpush1.msra.mxu0 0.0
        %318 = vmatprep.subr.mxu0 0.0
        %319 = vmatpush1.msra.mxu0 0.0
        %320 = vmatprep.subr.mxu0 0.0
        %321 = vmatpush1.msra.mxu0 0.0
        %322 = vmatprep.subr.mxu0 0.0
        %323 = vmatpush1.msra.mxu0 0.0
        %324 = vmatprep.subr.mxu0 0.0
        %325 = vmatpush1.msra.mxu0 0.0
        %326 = vmatprep.subr.mxu0 0.0
        %327 = vmatpush1.msra.mxu0 0.0
        %328 = vmatprep.subr.mxu0 0.0
        %329 = vmatpush1.msra.mxu0 0.0
        %330 = vmatprep.subr.mxu0 0.0
        %331 = vmatpush1.msra.mxu0 0.0
        %332 = vmatprep.subr.mxu0 0.0
        %333 = vmatpush1.msra.mxu0 0.0
        %334 = vmatprep.subr.mxu0 0.0
        %335 = vmatpush1.msra.mxu0 0.0
        %336 = vmatprep.subr.mxu0 0.0
        %337 = vmatpush1.msra.mxu0 0.0
        %338 = vmatprep.subr.mxu0 0.0
        %339 = vmatpush1.msra.mxu0 0.0
        %340 = vmatprep.subr.mxu0 0.0
        %341 = vmatpush1.msra.mxu0 0.0
        %342 = vmatprep.subr.mxu0 0.0
        %343 = vmatpush1.msra.mxu0 0.0
        %344 = vmatprep.subr.mxu0 0.0
        %345 = vmatpush1.msra.mxu0 0.0
        %346 = vmatprep.subr.mxu0 0.0
        %347 = vmatpush1.msra.mxu0 0.0
        %348 = vmatprep.subr.mxu0 0.0
        %349 = vmatpush1.msra.mxu0 0.0
        %350 = vmatprep.subr.mxu0 0.0
        %351 = vmatpush1.msra.mxu0 0.0
        %352 = vmatprep.subr.mxu0 0.0
        %353 = vmatpush1.msra.mxu0 0.0
        %354 = vmatprep.subr.mxu0 0.0
        %355 = vmatpush1.msra.mxu0 0.0
        %356 = vmatprep.subr.mxu0 0.0
        %357 = vmatpush1.msra.mxu0 0.0
        %358 = vmatprep.subr.mxu0 0.0
        %359 = vmatpush1.msra.mxu0 0.0
        %360 = vmatprep.subr.mxu0 0.0
        %361 = vmatpush1.msra.mxu0 0.0
        %362 = vmatprep.mubr.f32.mxu0 0.0
        %363 = vmatmul.mubr.f32.gmra.mrb[0].mxu0 %v296
        %v364 = vpop.f32.mrb[0].mxu0
        %v365 = vadd.f32 %v292, %v364
        %v366 = vpop.f32.mrb[0].mxu0
        %367 = vdwg.mxu0
        %v368 = vld [vmem:[%s276] sm:$0x3]
        %v369 = vxor.u32 %v365, 2147483648
        %v370 = vmul.f32 %v369, 1.442695
        %v371 = vpow.pop %v370
        %v372 = vadd.f32 %v371, 1.0
        %v373 = vrcp.pop %v372
        %v374 = vmul.f32 1.0, %v373
        %v375 = vlaneseq
        %v376 = vshrl.u32 %v375, 7
        %v377 = vsub.s32 0, %v376
        %v378 = vrot.slane %v368, %v377
        %v379 = vmul.f32 %v374, %v378
        %381 = vrot.lane.b32.xlu0 %v379, 64
        %v382 = vpop.permute.xlu0 %381
        %v384 = vadd.f32 %v365, %v382
        %v385 = vtanh.pop %v384
        %v386 = vlaneseq
        %v387 = vshrl.u32 %v386, 7
        %v388 = vsub.s32 1, %v387
        %v389 = vrot.slane %v368, %v388
        %391 = vrot.lane.b32.xlu0 %v385, 64
        %v392 = vpop.permute.xlu0 %391
        %v394 = vsub.f32 %v389, %v392
        %396 = vrot.lane.b32.xlu0 %v394, 32
        %v397 = vpop.permute.xlu0 %396
        %v399 = vmul.f32 %v374, %v397
        %401 = vrot.lane.b32.xlu0 %v399, 32
        %v402 = vpop.permute.xlu0 %401
        %v404 = vadd.f32 %v385, %v402
        %406 = vrot.lane.b32.xlu0 %v404, 64
        %v407 = vpop.permute.xlu0 %406
        %vm409 = vcmask 257024
        %410 = vst.msk [vmem:[%s282] sm:$0xf] %vm409, %v407
        %s411 = scalar_lea.vmem %s264, 4
        %v412 = vld [vmem:[%s411] sm:$0xf]
        %s413 = scalar_lea.vmem %s221, 16 [#allocation2]
        %v414 = vld [vmem:[%s413] sm:$0xff]
        %v415 = vld [vmem:[%s413 + $0x8] sm:$0xff]
        %s416 = scalar_lea.vmem %s270, 1
        %v417 = vld [vmem:[%s416] sm:$0x1]
        %v419 = vlaneseq
        %v420 = vshrl.u32 %v419, 7
        %v421 = vsub.s32 0, %v420
        %v422 = vrot.slane %v417, %v421
        %v425 = vsel %vm294, %v412, 0
        %427 = vmatprep.subr.mxu0 0.0
        %428 = vmatpush1.msra.mxu0 %v414
        %429 = vmatprep.subr.mxu0 0.0
        %430 = vmatpush1.msra.mxu0 %v415
        %431 = vmatprep.subr.mxu0 0.0
        %432 = vmatpush1.msra.mxu0 0.0
        %433 = vmatprep.subr.mxu0 0.0
        %434 = vmatpush1.msra.mxu0 0.0
        %435 = vmatprep.subr.mxu0 0.0
        %436 = vmatpush1.msra.mxu0 0.0
        %437 = vmatprep.subr.mxu0 0.0
        %438 = vmatpush1.msra.mxu0 0.0
        %439 = vmatprep.subr.mxu0 0.0
        %440 = vmatpush1.msra.mxu0 0.0
        %441 = vmatprep.subr.mxu0 0.0
        %442 = vmatpush1.msra.mxu0 0.0
        %443 = vmatprep.subr.mxu0 0.0
        %444 = vmatpush1.msra.mxu0 0.0
        %445 = vmatprep.subr.mxu0 0.0
        %446 = vmatpush1.msra.mxu0 0.0
        %447 = vmatprep.subr.mxu0 0.0
        %448 = vmatpush1.msra.mxu0 0.0
        %449 = vmatprep.subr.mxu0 0.0
        %450 = vmatpush1.msra.mxu0 0.0
        %451 = vmatprep.subr.mxu0 0.0
        %452 = vmatpush1.msra.mxu0 0.0
        %453 = vmatprep.subr.mxu0 0.0
        %454 = vmatpush1.msra.mxu0 0.0
        %455 = vmatprep.subr.mxu0 0.0
        %456 = vmatpush1.msra.mxu0 0.0
        %457 = vmatprep.subr.mxu0 0.0
        %458 = vmatpush1.msra.mxu0 0.0
        %459 = vmatprep.subr.mxu0 0.0
        %460 = vmatpush1.msra.mxu0 0.0
        %461 = vmatprep.subr.mxu0 0.0
        %462 = vmatpush1.msra.mxu0 0.0
        %463 = vmatprep.subr.mxu0 0.0
        %464 = vmatpush1.msra.mxu0 0.0
        %465 = vmatprep.subr.mxu0 0.0
        %466 = vmatpush1.msra.mxu0 0.0
        %467 = vmatprep.subr.mxu0 0.0
        %468 = vmatpush1.msra.mxu0 0.0
        %469 = vmatprep.subr.mxu0 0.0
        %470 = vmatpush1.msra.mxu0 0.0
        %471 = vmatprep.subr.mxu0 0.0
        %472 = vmatpush1.msra.mxu0 0.0
        %473 = vmatprep.subr.mxu0 0.0
        %474 = vmatpush1.msra.mxu0 0.0
        %475 = vmatprep.subr.mxu0 0.0
        %476 = vmatpush1.msra.mxu0 0.0
        %477 = vmatprep.subr.mxu0 0.0
        %478 = vmatpush1.msra.mxu0 0.0
        %479 = vmatprep.subr.mxu0 0.0
        %480 = vmatpush1.msra.mxu0 0.0
        %481 = vmatprep.subr.mxu0 0.0
        %482 = vmatpush1.msra.mxu0 0.0
        %483 = vmatprep.subr.mxu0 0.0
        %484 = vmatpush1.msra.mxu0 0.0
        %485 = vmatprep.subr.mxu0 0.0
        %486 = vmatpush1.msra.mxu0 0.0
        %487 = vmatprep.subr.mxu0 0.0
        %488 = vmatpush1.msra.mxu0 0.0
        %489 = vmatprep.subr.mxu0 0.0
        %490 = vmatpush1.msra.mxu0 0.0
        %491 = vmatprep.mubr.f32.mxu0 0.0
        %492 = vmatmul.mubr.f32.gmra.mrb[0].mxu0 %v425
        %v493 = vpop.f32.mrb[0].mxu0
        %v494 = vadd.f32 %v422, %v493
        %v495 = vpop.f32.mrb[0].mxu0
        %496 = vdwg.mxu0
        %s497 = scalar_lea.vmem %s276, 2
        %v498 = vld [vmem:[%s497] sm:$0x3]
        %v499 = vxor.u32 %v494, 2147483648
        %v500 = vmul.f32 %v499, 1.442695
        %v501 = vpow.pop %v500
        %v502 = vadd.f32 %v501, 1.0
        %v503 = vrcp.pop %v502
        %v504 = vmul.f32 1.0, %v503
        %v505 = vlaneseq
        %v506 = vshrl.u32 %v505, 7
        %v507 = vsub.s32 0, %v506
        %v508 = vrot.slane %v498, %v507
        %v509 = vmul.f32 %v504, %v508
        %511 = vrot.lane.b32.xlu0 %v509, 64
        %v512 = vpop.permute.xlu0 %511
        %v514 = vadd.f32 %v494, %v512
        %v515 = vtanh.pop %v514
        %v516 = vlaneseq
        %v517 = vshrl.u32 %v516, 7
        %v518 = vsub.s32 1, %v517
        %v519 = vrot.slane %v498, %v518
        %521 = vrot.lane.b32.xlu0 %v515, 64
        %v522 = vpop.permute.xlu0 %521
        %v524 = vsub.f32 %v519, %v522
        %526 = vrot.lane.b32.xlu0 %v524, 32
        %v527 = vpop.permute.xlu0 %526
        %v529 = vmul.f32 %v504, %v527
        %531 = vrot.lane.b32.xlu0 %v529, 32
        %v532 = vpop.permute.xlu0 %531
        %v534 = vadd.f32 %v515, %v532
        %536 = vrot.lane.b32.xlu0 %v534, 64
        %v537 = vpop.permute.xlu0 %536
        %s539 = scalar_lea.vmem %s282, 4
        %540 = vst.msk [vmem:[%s539] sm:$0xf] %vm409, %v537
        %s541 = scalar_lea.vmem %s264, 8
        %v542 = vld [vmem:[%s541] sm:$0xf]
        %s543 = scalar_lea.vmem %s221, 32 [#allocation2]
        %v544 = vld [vmem:[%s543] sm:$0xff]
        %v545 = vld [vmem:[%s543 + $0x8] sm:$0xff]
        %s546 = scalar_lea.vmem %s270, 2
        %v547 = vld [vmem:[%s546] sm:$0x1]
        %v549 = vlaneseq
        %v550 = vshrl.u32 %v549, 7
        %v551 = vsub.s32 0, %v550
        %v552 = vrot.slane %v547, %v551
        %v555 = vsel %vm294, %v542, 0
        %557 = vmatprep.subr.mxu0 0.0
        %558 = vmatpush1.msra.mxu0 %v544
        %559 = vmatprep.subr.mxu0 0.0
        %560 = vmatpush1.msra.mxu0 %v545
        %561 = vmatprep.subr.mxu0 0.0
        %562 = vmatpush1.msra.mxu0 0.0
        %563 = vmatprep.subr.mxu0 0.0
        %564 = vmatpush1.msra.mxu0 0.0
        %565 = vmatprep.subr.mxu0 0.0
        %566 = vmatpush1.msra.mxu0 0.0
        %567 = vmatprep.subr.mxu0 0.0
        %568 = vmatpush1.msra.mxu0 0.0
        %569 = vmatprep.subr.mxu0 0.0
        %570 = vmatpush1.msra.mxu0 0.0
        %571 = vmatprep.subr.mxu0 0.0
        %572 = vmatpush1.msra.mxu0 0.0
        %573 = vmatprep.subr.mxu0 0.0
        %574 = vmatpush1.msra.mxu0 0.0
        %575 = vmatprep.subr.mxu0 0.0
        %576 = vmatpush1.msra.mxu0 0.0
        %577 = vmatprep.subr.mxu0 0.0
        %578 = vmatpush1.msra.mxu0 0.0
        %579 = vmatprep.subr.mxu0 0.0
        %580 = vmatpush1.msra.mxu0 0.0
        %581 = vmatprep.subr.mxu0 0.0
        %582 = vmatpush1.msra.mxu0 0.0
        %583 = vmatprep.subr.mxu0 0.0
        %584 = vmatpush1.msra.mxu0 0.0
        %585 = vmatprep.subr.mxu0 0.0
        %586 = vmatpush1.msra.mxu0 0.0
        %587 = vmatprep.subr.mxu0 0.0
        %588 = vmatpush1.msra.mxu0 0.0
        %589 = vmatprep.subr.mxu0 0.0
        %590 = vmatpush1.msra.mxu0 0.0
        %591 = vmatprep.subr.mxu0 0.0
        %592 = vmatpush1.msra.mxu0 0.0
        %593 = vmatprep.subr.mxu0 0.0
        %594 = vmatpush1.msra.mxu0 0.0
        %595 = vmatprep.subr.mxu0 0.0
        %596 = vmatpush1.msra.mxu0 0.0
        %597 = vmatprep.subr.mxu0 0.0
        %598 = vmatpush1.msra.mxu0 0.0
        %599 = vmatprep.subr.mxu0 0.0
        %600 = vmatpush1.msra.mxu0 0.0
        %601 = vmatprep.subr.mxu0 0.0
        %602 = vmatpush1.msra.mxu0 0.0
        %603 = vmatprep.subr.mxu0 0.0
        %604 = vmatpush1.msra.mxu0 0.0
        %605 = vmatprep.subr.mxu0 0.0
        %606 = vmatpush1.msra.mxu0 0.0
        %607 = vmatprep.subr.mxu0 0.0
        %608 = vmatpush1.msra.mxu0 0.0
        %609 = vmatprep.subr.mxu0 0.0
        %610 = vmatpush1.msra.mxu0 0.0
        %611 = vmatprep.subr.mxu0 0.0
        %612 = vmatpush1.msra.mxu0 0.0
        %613 = vmatprep.subr.mxu0 0.0
        %614 = vmatpush1.msra.mxu0 0.0
        %615 = vmatprep.subr.mxu0 0.0
        %616 = vmatpush1.msra.mxu0 0.0
        %617 = vmatprep.subr.mxu0 0.0
        %618 = vmatpush1.msra.mxu0 0.0
        %619 = vmatprep.subr.mxu0 0.0
        %620 = vmatpush1.msra.mxu0 0.0
        %621 = vmatprep.mubr.f32.mxu0 0.0
        %622 = vmatmul.mubr.f32.gmra.mrb[0].mxu0 %v555
        %v623 = vpop.f32.mrb[0].mxu0
        %v624 = vadd.f32 %v552, %v623
        %v625 = vpop.f32.mrb[0].mxu0
        %626 = vdwg.mxu0
        %s627 = scalar_lea.vmem %s276, 4
        %v628 = vld [vmem:[%s627] sm:$0x3]
        %v629 = vxor.u32 %v624, 2147483648
        %v630 = vmul.f32 %v629, 1.442695
        %v631 = vpow.pop %v630
        %v632 = vadd.f32 %v631, 1.0
        %v633 = vrcp.pop %v632
        %v634 = vmul.f32 1.0, %v633
        %v635 = vlaneseq
        %v636 = vshrl.u32 %v635, 7
        %v637 = vsub.s32 0, %v636
        %v638 = vrot.slane %v628, %v637
        %v639 = vmul.f32 %v634, %v638
        %641 = vrot.lane.b32.xlu0 %v639, 64
        %v642 = vpop.permute.xlu0 %641
        %v644 = vadd.f32 %v624, %v642
        %v645 = vtanh.pop %v644
        %v646 = vlaneseq
        %v647 = vshrl.u32 %v646, 7
        %v648 = vsub.s32 1, %v647
        %v649 = vrot.slane %v628, %v648
        %651 = vrot.lane.b32.xlu0 %v645, 64
        %v652 = vpop.permute.xlu0 %651
        %v654 = vsub.f32 %v649, %v652
        %656 = vrot.lane.b32.xlu0 %v654, 32
        %v657 = vpop.permute.xlu0 %656
        %v659 = vmul.f32 %v634, %v657
        %661 = vrot.lane.b32.xlu0 %v659, 32
        %v662 = vpop.permute.xlu0 %661
        %v664 = vadd.f32 %v645, %v662
        %666 = vrot.lane.b32.xlu0 %v664, 64
        %v667 = vpop.permute.xlu0 %666
        %s669 = scalar_lea.vmem %s282, 8
        %670 = vst.msk [vmem:[%s669] sm:$0xf] %vm409, %v667
        %s671 = scalar_lea.vmem %s264, 12
        %v672 = vld [vmem:[%s671] sm:$0xf]
        %s673 = scalar_lea.vmem %s221, 48 [#allocation2]
        %v674 = vld [vmem:[%s673] sm:$0xff]
        %v675 = vld [vmem:[%s673 + $0x8] sm:$0xff]
        %s676 = scalar_lea.vmem %s270, 3
        %v677 = vld [vmem:[%s676] sm:$0x1]
        %v679 = vlaneseq
        %v680 = vshrl.u32 %v679, 7
        %v681 = vsub.s32 0, %v680
        %v682 = vrot.slane %v677, %v681
        %v685 = vsel %vm294, %v672, 0
        %687 = vmatprep.subr.mxu0 0.0
        %688 = vmatpush1.msra.mxu0 %v674
        %689 = vmatprep.subr.mxu0 0.0
        %690 = vmatpush1.msra.mxu0 %v675
        %691 = vmatprep.subr.mxu0 0.0
        %692 = vmatpush1.msra.mxu0 0.0
        %693 = vmatprep.subr.mxu0 0.0
        %694 = vmatpush1.msra.mxu0 0.0
        %695 = vmatprep.subr.mxu0 0.0
        %696 = vmatpush1.msra.mxu0 0.0
        %697 = vmatprep.subr.mxu0 0.0
        %698 = vmatpush1.msra.mxu0 0.0
        %699 = vmatprep.subr.mxu0 0.0
        %700 = vmatpush1.msra.mxu0 0.0
        %701 = vmatprep.subr.mxu0 0.0
        %702 = vmatpush1.msra.mxu0 0.0
        %703 = vmatprep.subr.mxu0 0.0
        %704 = vmatpush1.msra.mxu0 0.0
        %705 = vmatprep.subr.mxu0 0.0
        %706 = vmatpush1.msra.mxu0 0.0
        %707 = vmatprep.subr.mxu0 0.0
        %708 = vmatpush1.msra.mxu0 0.0
        %709 = vmatprep.subr.mxu0 0.0
        %710 = vmatpush1.msra.mxu0 0.0
        %711 = vmatprep.subr.mxu0 0.0
        %712 = vmatpush1.msra.mxu0 0.0
        %713 = vmatprep.subr.mxu0 0.0
        %714 = vmatpush1.msra.mxu0 0.0
        %715 = vmatprep.subr.mxu0 0.0
        %716 = vmatpush1.msra.mxu0 0.0
        %717 = vmatprep.subr.mxu0 0.0
        %718 = vmatpush1.msra.mxu0 0.0
        %719 = vmatprep.subr.mxu0 0.0
        %720 = vmatpush1.msra.mxu0 0.0
        %721 = vmatprep.subr.mxu0 0.0
        %722 = vmatpush1.msra.mxu0 0.0
        %723 = vmatprep.subr.mxu0 0.0
        %724 = vmatpush1.msra.mxu0 0.0
        %725 = vmatprep.subr.mxu0 0.0
        %726 = vmatpush1.msra.mxu0 0.0
        %727 = vmatprep.subr.mxu0 0.0
        %728 = vmatpush1.msra.mxu0 0.0
        %729 = vmatprep.subr.mxu0 0.0
        %730 = vmatpush1.msra.mxu0 0.0
        %731 = vmatprep.subr.mxu0 0.0
        %732 = vmatpush1.msra.mxu0 0.0
        %733 = vmatprep.subr.mxu0 0.0
        %734 = vmatpush1.msra.mxu0 0.0
        %735 = vmatprep.subr.mxu0 0.0
        %736 = vmatpush1.msra.mxu0 0.0
        %737 = vmatprep.subr.mxu0 0.0
        %738 = vmatpush1.msra.mxu0 0.0
        %739 = vmatprep.subr.mxu0 0.0
        %740 = vmatpush1.msra.mxu0 0.0
        %741 = vmatprep.subr.mxu0 0.0
        %742 = vmatpush1.msra.mxu0 0.0
        %743 = vmatprep.subr.mxu0 0.0
        %744 = vmatpush1.msra.mxu0 0.0
        %745 = vmatprep.subr.mxu0 0.0
        %746 = vmatpush1.msra.mxu0 0.0
        %747 = vmatprep.subr.mxu0 0.0
        %748 = vmatpush1.msra.mxu0 0.0
        %749 = vmatprep.subr.mxu0 0.0
        %750 = vmatpush1.msra.mxu0 0.0
        %751 = vmatprep.mubr.f32.mxu0 0.0
        %752 = vmatmul.mubr.f32.gmra.mrb[0].mxu0 %v685
        %v753 = vpop.f32.mrb[0].mxu0
        %v754 = vadd.f32 %v682, %v753
        %v755 = vpop.f32.mrb[0].mxu0
        %756 = vdwg.mxu0
        %s757 = scalar_lea.vmem %s276, 6
        %v758 = vld [vmem:[%s757] sm:$0x3]
        %v759 = vxor.u32 %v754, 2147483648
        %v760 = vmul.f32 %v759, 1.442695
        %v761 = vpow.pop %v760
        %v762 = vadd.f32 %v761, 1.0
        %v763 = vrcp.pop %v762
        %v764 = vmul.f32 1.0, %v763
        %v765 = vlaneseq
        %v766 = vshrl.u32 %v765, 7
        %v767 = vsub.s32 0, %v766
        %v768 = vrot.slane %v758, %v767
        %v769 = vmul.f32 %v764, %v768
        %771 = vrot.lane.b32.xlu0 %v769, 64
        %v772 = vpop.permute.xlu0 %771
        %v774 = vadd.f32 %v754, %v772
        %v775 = vtanh.pop %v774
        %v776 = vlaneseq
        %v777 = vshrl.u32 %v776, 7
        %v778 = vsub.s32 1, %v777
        %v779 = vrot.slane %v758, %v778
        %781 = vrot.lane.b32.xlu0 %v775, 64
        %v782 = vpop.permute.xlu0 %781
        %v784 = vsub.f32 %v779, %v782
        %786 = vrot.lane.b32.xlu0 %v784, 32
        %v787 = vpop.permute.xlu0 %786
        %v789 = vmul.f32 %v764, %v787
        %791 = vrot.lane.b32.xlu0 %v789, 32
        %v792 = vpop.permute.xlu0 %791
        %v794 = vadd.f32 %v775, %v792
        %796 = vrot.lane.b32.xlu0 %v794, 64
        %v797 = vpop.permute.xlu0 %796
        %s799 = scalar_lea.vmem %s282, 12
        %800 = vst.msk [vmem:[%s799] sm:$0xf] %vm409, %v797
        %s801 = smul.u32 4, %s18
        %p802 = scmp.lt.s32.totalorder %s801, 7
        %s803 = scalar_select %p802, %s801, 7
        %s804 = smul.addr %s803, 4
        %s805 = scalar_lea.vmem %s4, %s804
        // Predicated region
        $region41: #{unit_wise_gru_forward.1} parent=35 // pred_check
          %p806 = pneg %p140
        $region42: #{unit_wise_gru_forward.1} parent=35 // pred_check_branch
          %808 = sbr.rel (%p806) target = $region44
        $region43: #{unit_wise_gru_forward.1} parent=35 // pred_region
          %s809 = smul.u32 4, %s18
        $region44: #{unit_wise_gru_forward.1} parent=35 // pred_fallthru
          _
      $region36: #{unit_wise_gru_forward.1} parent=5 // pred_fallthru
        _
      %p810 = scmp.le.s32.totalorder 2, %s13
      // Predicated region
      $region45: #{unit_wise_gru_forward.1} parent=5 // pred_check
        %p811 = pneg %p810
      $region46: #{unit_wise_gru_forward.1} parent=5 // pred_check_branch
        %813 = sbr.rel (%p811) target = $region48
      $region47: #{unit_wise_gru_forward.1} parent=5 // pred_region
        %s814 = ssub.s32 %s13, 2
        // Predicated region
        $region49: #{unit_wise_gru_forward.1} parent=47 // pred_check
          %p815 = pneg %p146
        $region50: #{unit_wise_gru_forward.1} parent=47 // pred_check_branch
          %817 = sbr.rel (%p815) target = $region52
        $region51: #{unit_wise_gru_forward.1} parent=47 // pred_region
          %s818 = smul.u32 4, %s19
          %p819 = scmp.lt.s32.totalorder %s818, 7
          %s820 = scalar_select %p819, %s818, 7
          %s821 = smul.addr %s820, 4
          %s822 = scalar_lea.vmem %s4, %s821
        $region52: #{unit_wise_gru_forward.1} parent=47 // pred_fallthru
          _
      $region48: #{unit_wise_gru_forward.1} parent=5 // pred_fallthru
        _
    $region6: #{unit_wise_gru_forward.1} parent=1 // loop_footer
      %s17 = sadd.s32 1, %s13
    $region7: #{unit_wise_gru_forward.1} parent=1 // loop_footer_branch
      %12 = sbr.rel target = $region3
    $region8: #{unit_wise_gru_forward.1} parent=1 // loop_exit
      _
    %823 = vsyncpa [#allocation3], 1
    %s824 = scalar_lea.sflag [#allocation3], 1
    %825 = vsyncpa %s824, 1

</llo_original>
